<compile_context>
chip_gen: v7x
topology: tpu7x:2x2x1
jax: 0.10.0
libtpu: 0.0.40
codegen_flags: <defaults>
</compile_context>

<pallas_src>
import functools

import jax
import jax.numpy as jnp
from jax.experimental import pallas as pl
from jax.experimental.pallas import tpu as pltpu


def _round_up(x, m):
    return ((x + m - 1) // m) * m


def _critic_kernel(n_linear, obs_ref, *refs):
    """Fused MLP critic forward on one batch tile.

    refs = (w0, b0, w1, b1, ..., w_head, b_head, out_ref)
    All weights/biases are fully resident in VMEM (constant block index);
    obs_ref / out_ref are (TILE_B, ·) tiles of the batch.
    """
    out_ref = refs[-1]
    param_refs = refs[:-1]

    x = obs_ref[...].astype(jnp.float32)
    for i in range(n_linear):
        w = param_refs[2 * i][...].astype(jnp.float32)
        b = param_refs[2 * i + 1][...].astype(jnp.float32)
        # MXU matmul with f32 accumulation, bias broadcast over batch rows.
        x = jnp.dot(x, w, preferred_element_type=jnp.float32) + b
        if i < n_linear - 1:          # Tanh on hidden layers only, not the head
            x = jnp.tanh(x)
    out_ref[...] = x.astype(out_ref.dtype)


def mlp_critic_forward(obs, params, *, tile_b=None):
    """obs: (B, obs_dim) f32.  params: list of (W, b) with W:(in,out), b:(1,out)."""
    batch, obs_dim = obs.shape
    n_values = params[-1][0].shape[1]
    n_linear = len(params)

    # Batch tile: multiple of 8 (f32 sublane), capped at 1024 rows.
    # Double-buffered obs tile = 2 * 1024 * obs_dim * 4B -> well under the
    # scoped VMEM limit on v5e/v6e (128 MiB) and v7x (64 MiB).
    if tile_b is None:
        tile_b = min(1024, _round_up(batch, 8))
    grid = (pl.cdiv(batch, tile_b),)

    flat_params = []
    for w, b in params:
        flat_params += [w, b]

    # obs / out are tiled over batch; weights & biases use a constant block
    # index so Pallas keeps them resident in VMEM across grid iterations.
    in_specs = [pl.BlockSpec((tile_b, obs_dim), lambda i: (i, 0))]
    for p in flat_params:
        in_specs.append(pl.BlockSpec(p.shape, lambda i: (0, 0)))
    out_spec = pl.BlockSpec((tile_b, n_values), lambda i: (i, 0))

    # Advisory cost estimate so XLA can schedule/overlap this custom call.
    dims = [obs_dim] + [w.shape[1] for w, _ in params]
    flops = sum(2 * batch * dims[i] * dims[i + 1] for i in range(n_linear))
    transcendentals = batch * sum(dims[1:-1])          # tanh on hidden layers
    param_bytes = sum(int(p.size) * p.dtype.itemsize for p in flat_params)
    bytes_accessed = batch * (obs_dim + n_values) * 4 + param_bytes

    out = pl.pallas_call(
        functools.partial(_critic_kernel, n_linear),
        out_shape=jax.ShapeDtypeStruct((batch, n_values), jnp.float32),
        grid=grid,
        in_specs=in_specs,
        out_specs=out_spec,
        compiler_params=pltpu.CompilerParams(
            dimension_semantics=("parallel",)),   # shard batch tiles across TCs (v7x)
        cost_estimate=pl.CostEstimate(
            flops=flops,
            transcendentals=transcendentals,
            bytes_accessed=bytes_accessed),
    )(obs, *flat_params)

    if n_values == 1:
        out = out[:, 0]               # squeeze(-1), matching PyTorch
    return out


def init_params(key, sizes, n_values):
    """Deterministic PyTorch-style init: U(-1/sqrt(fan_in), 1/sqrt(fan_in))."""
    dims = list(sizes) + [n_values]
    params = []
    for i in range(len(dims) - 1):
        fan_in, fan_out = dims[i], dims[i + 1]
        key, kw, kb = jax.random.split(key, 3)
        bound = 1.0 / jnp.sqrt(jnp.float32(fan_in))
        w = jax.random.uniform(kw, (fan_in, fan_out), jnp.float32, -bound, bound)
        b = jax.random.uniform(kb, (1, fan_out), jnp.float32, -bound, bound)
        params.append((w, b))
    return params


if __name__ == "__main__":
    key = jax.random.PRNGKey(0)

    # Synthetic config consistent with the module: 1-D observation space.
    obs_dim = 16
    mlp_sizes = [32, 32]
    n_values = 1
    batch = 8

    sizes = [obs_dim] + mlp_sizes          # self.sizes in the module
    k_obs, k_par = jax.random.split(key)
    obs = jax.random.normal(k_obs, (batch, obs_dim), jnp.float32)
    params = init_params(k_par, sizes, n_values)

    vals = mlp_critic_forward(obs, params)
    vals = jax.block_until_ready(vals)
    assert vals.shape == (batch,), vals.shape

    # Pure-JAX reference check of the fused kernel.
    x = obs
    for i, (w, b) in enumerate(params):
        x = x @ w + b
        if i < len(params) - 1:
            x = jnp.tanh(x)
    ref = x[:, 0]
    assert jnp.allclose(vals, ref, atol=1e-5, rtol=1e-5)

    print("KERNEL_OK")
</pallas_src>

<mosaic_0001>
module attributes {stable_mosaic.version = 11 : i64} {
  func.func @_critic_kernel(%arg0: i32, %arg1: memref<8x16xf32, #tpu.memory_space<vmem>>, %arg2: memref<16x32xf32, #tpu.memory_space<vmem>>, %arg3: memref<1x32xf32, #tpu.memory_space<vmem>>, %arg4: memref<32x32xf32, #tpu.memory_space<vmem>>, %arg5: memref<1x32xf32, #tpu.memory_space<vmem>>, %arg6: memref<32x1xf32, #tpu.memory_space<vmem>>, %arg7: memref<1x1xf32, #tpu.memory_space<vmem>>, %arg8: memref<8x1xf32, #tpu.memory_space<vmem>>) attributes {dimension_semantics = [#tpu.dimension_semantics<parallel>], iteration_bounds = array<i64: 1>, scalar_prefetch = 0 : i64, scratch_operands = 0 : i64, tpu.core_type = #tpu.core_type<tc>, window_params = [{transform_indices = @transform_0, window_bounds = array<i64: 8, 16>}, {pipeline_mode = #tpu.pipeline_mode<synchronous>, transform_indices = @transform_1, window_bounds = array<i64: 16, 32>}, {pipeline_mode = #tpu.pipeline_mode<synchronous>, transform_indices = @transform_2, window_bounds = array<i64: 1, 32>}, {pipeline_mode = #tpu.pipeline_mode<synchronous>, transform_indices = @transform_3, window_bounds = array<i64: 32, 32>}, {pipeline_mode = #tpu.pipeline_mode<synchronous>, transform_indices = @transform_4, window_bounds = array<i64: 1, 32>}, {pipeline_mode = #tpu.pipeline_mode<synchronous>, transform_indices = @transform_5, window_bounds = array<i64: 32, 1>}, {pipeline_mode = #tpu.pipeline_mode<synchronous>, transform_indices = @transform_6, window_bounds = array<i64: 1, 1>}, {transform_indices = @transform_7, window_bounds = array<i64: 8, 1>}]} {
    %c0 = arith.constant 0 : index
    %c0_0 = arith.constant 0 : index
    %0 = vector.load %arg1[%c0, %c0_0] : memref<8x16xf32, #tpu.memory_space<vmem>>, vector<8x16xf32>
    %c0_1 = arith.constant 0 : index
    %c0_2 = arith.constant 0 : index
    %1 = vector.load %arg2[%c0_1, %c0_2] : memref<16x32xf32, #tpu.memory_space<vmem>>, vector<16x32xf32>
    %c0_3 = arith.constant 0 : index
    %c0_4 = arith.constant 0 : index
    %2 = vector.load %arg3[%c0_3, %c0_4] : memref<1x32xf32, #tpu.memory_space<vmem>>, vector<1x32xf32>
    %cst = arith.constant dense<0.000000e+00> : vector<8x32xf32>
    %3 = tpu.matmul %0, %1, %cst {dimension_numbers = #tpu.dot_dimension_numbers<[1], [0], [0], [1], [0, 0, 1, 1], [], []>} : vector<8x16xf32>, vector<16x32xf32>, vector<8x32xf32> -> vector<8x32xf32>
    %4 = vector.broadcast %2 : vector<1x32xf32> to vector<8x32xf32>
    %5 = arith.addf %3, %4 : vector<8x32xf32>
    %6 = math.tanh %5 : vector<8x32xf32>
    %c0_5 = arith.constant 0 : index
    %c0_6 = arith.constant 0 : index
    %7 = vector.load %arg4[%c0_5, %c0_6] : memref<32x32xf32, #tpu.memory_space<vmem>>, vector<32x32xf32>
    %c0_7 = arith.constant 0 : index
    %c0_8 = arith.constant 0 : index
    %8 = vector.load %arg5[%c0_7, %c0_8] : memref<1x32xf32, #tpu.memory_space<vmem>>, vector<1x32xf32>
    %cst_9 = arith.constant dense<0.000000e+00> : vector<8x32xf32>
    %9 = tpu.matmul %6, %7, %cst_9 {dimension_numbers = #tpu.dot_dimension_numbers<[1], [0], [0], [1], [0, 0, 1, 1], [], []>} : vector<8x32xf32>, vector<32x32xf32>, vector<8x32xf32> -> vector<8x32xf32>
    %10 = vector.broadcast %8 : vector<1x32xf32> to vector<8x32xf32>
    %11 = arith.addf %9, %10 : vector<8x32xf32>
    %12 = math.tanh %11 : vector<8x32xf32>
    %c0_10 = arith.constant 0 : index
    %c0_11 = arith.constant 0 : index
    %13 = vector.load %arg6[%c0_10, %c0_11] : memref<32x1xf32, #tpu.memory_space<vmem>>, vector<32x1xf32>
    %c0_12 = arith.constant 0 : index
    %c0_13 = arith.constant 0 : index
    %14 = vector.load %arg7[%c0_12, %c0_13] : memref<1x1xf32, #tpu.memory_space<vmem>>, vector<1x1xf32>
    %cst_14 = arith.constant dense<0.000000e+00> : vector<8x1xf32>
    %15 = tpu.matmul %12, %13, %cst_14 {dimension_numbers = #tpu.dot_dimension_numbers<[1], [0], [0], [1], [0, 0, 1, 1], [], []>} : vector<8x32xf32>, vector<32x1xf32>, vector<8x1xf32> -> vector<8x1xf32>
    %16 = vector.broadcast %14 : vector<1x1xf32> to vector<8x1xf32>
    %17 = arith.addf %15, %16 : vector<8x1xf32>
    %c0_15 = arith.constant 0 : index
    %c0_16 = arith.constant 0 : index
    %18 = vector.load %arg8[%c0_15, %c0_16] : memref<8x1xf32, #tpu.memory_space<vmem>>, vector<8x1xf32>
    tpu.vector_store %arg8[%c0_15, %c0_16], %17 {strides = array<i32>} : memref<8x1xf32, #tpu.memory_space<vmem>>, vector<8x1xf32>,
    return
  }
  func.func @transform_0(%arg0: i32) -> (i32, i32) {
    %c0_i32 = arith.constant 0 : i32
    %c0_i32_0 = arith.constant 0 : i32
    return %arg0, %c0_i32 : i32, i32
  }
  func.func @transform_1(%arg0: i32) -> (i32, i32) {
    %c0_i32 = arith.constant 0 : i32
    %c0_i32_0 = arith.constant 0 : i32
    %c0_i32_1 = arith.constant 0 : i32
    return %c0_i32, %c0_i32_0 : i32, i32
  }
  func.func @transform_2(%arg0: i32) -> (i32, i32) {
    %c0_i32 = arith.constant 0 : i32
    %c0_i32_0 = arith.constant 0 : i32
    %c0_i32_1 = arith.constant 0 : i32
    return %c0_i32, %c0_i32_0 : i32, i32
  }
  func.func @transform_3(%arg0: i32) -> (i32, i32) {
    %c0_i32 = arith.constant 0 : i32
    %c0_i32_0 = arith.constant 0 : i32
    %c0_i32_1 = arith.constant 0 : i32
    return %c0_i32, %c0_i32_0 : i32, i32
  }
  func.func @transform_4(%arg0: i32) -> (i32, i32) {
    %c0_i32 = arith.constant 0 : i32
    %c0_i32_0 = arith.constant 0 : i32
    %c0_i32_1 = arith.constant 0 : i32
    return %c0_i32, %c0_i32_0 : i32, i32
  }
  func.func @transform_5(%arg0: i32) -> (i32, i32) {
    %c0_i32 = arith.constant 0 : i32
    %c0_i32_0 = arith.constant 0 : i32
    %c0_i32_1 = arith.constant 0 : i32
    return %c0_i32, %c0_i32_0 : i32, i32
  }
  func.func @transform_6(%arg0: i32) -> (i32, i32) {
    %c0_i32 = arith.constant 0 : i32
    %c0_i32_0 = arith.constant 0 : i32
    %c0_i32_1 = arith.constant 0 : i32
    return %c0_i32, %c0_i32_0 : i32, i32
  }
  func.func @transform_7(%arg0: i32) -> (i32, i32) {
    %c0_i32 = arith.constant 0 : i32
    %c0_i32_0 = arith.constant 0 : i32
    return %arg0, %c0_i32 : i32, i32
  }
}

</mosaic_0001>

<llo_original>
// kernel: tpu_custom_call.1
$region0: #{tpu_custom_call.1}
  #allocation0 [shape = 'u32[]', space=smem, size = 0x4, offset = 0x4, fixed_abs, tag = 'smem constant byte address 0x4 - core index']
  #allocation1 [shape = 'u32[144,128]{1,0:T(1,128)}', space=vmem, size = 0x12000, scoped, tag = 'internal scratch']
  #allocation2 [shape = 'f32[1,1]{1,0:T(1,128)S(1)}', space=vmem, size = 0x200, scoped, tag = 'scoped memory for tpu_custom_call.1']
  %s0 = inlined_call_operand.hbm [shape: f32[8,16], index: 0, kind: input, shape index: {}]
  %s1 = inlined_call_operand.vmem [shape: f32[16,32], index: 1, kind: input, shape index: {}]
  %s2 = inlined_call_operand.hbm [shape: f32[1,32], index: 2, kind: input, shape index: {}]
  %s3 = inlined_call_operand.vmem [shape: f32[32,32], index: 3, kind: input, shape index: {}]
  %s4 = inlined_call_operand.vmem [shape: f32[1,32], index: 4, kind: input, shape index: {}]
  %s5 = inlined_call_operand.vmem [shape: f32[32,1], index: 5, kind: input, shape index: {}]
  %s6 = inlined_call_operand.<no memory space> [shape: f32[1,1], index: 6, kind: input, shape index: {}]
  %s7 = inlined_call_operand.vmem [shape: f32[8,1], index: 7, kind: output, shape index: {}]
  %s8 = sld [smem:[#allocation0]]
  $region46: #{tpu_custom_call.1} parent=0
    _
  %s10 = ssub.s32 1, %s8
  %s11 = scalar_select 0, %s10, %s8
  %v12 = vstv %s6
  %13 = vst [vmem:[#allocation2] sm:$0x1] %v12
  $region1: #{tpu_custom_call.1} parent=0
    #allocation3 [shape = 'u8[4096]{0}', space=vmem, size = 0x1000, scoped, tag = 'input window, operand 0, single buffered']
    #allocation4 [shape = 's32[1]{0}', space=sflag, size = 0x4, scoped, tag = 'scoped memory for tpu_custom_call.1']
    #allocation5 [shape = 'u8[512]{0}', space=vmem, size = 0x400, scoped, tag = 'input window, operand 2, single buffered']
    #allocation6 [shape = 's32[1]{0}', space=sflag, size = 0x4, scoped, tag = 'scoped memory for tpu_custom_call.1']
    %14 = vsyncpa [#allocation4], 0
    %15 = vsyncpa [#allocation6], 0
    // Predicated region
    $region2: #{tpu_custom_call.1} parent=1 // pred_check
      _
    $region3: #{tpu_custom_call.1} parent=1 // pred_check_branch
      %17 = sbr.rel (0) target = $region5
    $region4: #{tpu_custom_call.1} parent=1 // pred_region
      %s19 = ssub.s32 128, 128
      %20 = vsyncadd [#allocation4], %s19
      %s22 = sshll.u32 [#allocation3], 4
      %s23 = int_to_ptr.vmem [resolvable:$true] %s22
      %25 = dma.hbm_to_vmem [thread:$0]  %s0, 128, %s23, [#allocation4]
    $region5: #{tpu_custom_call.1} parent=1 // pred_fallthru
      _
    // Predicated region
    $region6: #{tpu_custom_call.1} parent=1 // pred_check
      _
    $region7: #{tpu_custom_call.1} parent=1 // pred_check_branch
      %27 = sbr.rel (0) target = $region9
    $region8: #{tpu_custom_call.1} parent=1 // pred_region
      _
    $region9: #{tpu_custom_call.1} parent=1 // pred_fallthru
      _
    // Predicated region
    $region10: #{tpu_custom_call.1} parent=1 // pred_check
      _
    $region11: #{tpu_custom_call.1} parent=1 // pred_check_branch
      %29 = sbr.rel (0) target = $region13
    $region12: #{tpu_custom_call.1} parent=1 // pred_region
      %s31 = ssub.s32 16, 16
      %32 = vsyncadd [#allocation6], %s31
      %s34 = sshll.u32 [#allocation5], 4
      %s35 = int_to_ptr.vmem [resolvable:$true] %s34
      %37 = dma.hbm_to_vmem [thread:$0]  %s2, 16, %s35, [#allocation6]
    $region13: #{tpu_custom_call.1} parent=1 // pred_fallthru
      _
    // Predicated region
    $region14: #{tpu_custom_call.1} parent=1 // pred_check
      _
    $region15: #{tpu_custom_call.1} parent=1 // pred_check_branch
      %39 = sbr.rel (0) target = $region17
    $region16: #{tpu_custom_call.1} parent=1 // pred_region
      _
    $region17: #{tpu_custom_call.1} parent=1 // pred_fallthru
      _
    // Predicated region
    $region18: #{tpu_custom_call.1} parent=1 // pred_check
      _
    $region19: #{tpu_custom_call.1} parent=1 // pred_check_branch
      %41 = sbr.rel (0) target = $region21
    $region20: #{tpu_custom_call.1} parent=1 // pred_region
      _
    $region21: #{tpu_custom_call.1} parent=1 // pred_fallthru
      _
    // Predicated region
    $region22: #{tpu_custom_call.1} parent=1 // pred_check
      _
    $region23: #{tpu_custom_call.1} parent=1 // pred_check_branch
      %43 = sbr.rel (0) target = $region25
    $region24: #{tpu_custom_call.1} parent=1 // pred_region
      _
    $region25: #{tpu_custom_call.1} parent=1 // pred_fallthru
      _
    // Predicated region
    $region26: #{tpu_custom_call.1} parent=1 // pred_check
      _
    $region27: #{tpu_custom_call.1} parent=1 // pred_check_branch
      %45 = sbr.rel (0) target = $region29
    $region28: #{tpu_custom_call.1} parent=1 // pred_region
      _
    $region29: #{tpu_custom_call.1} parent=1 // pred_fallthru
      _
    // Predicated region
    $region30: #{tpu_custom_call.1} parent=1 // pred_check
      _
    $region31: #{tpu_custom_call.1} parent=1 // pred_check_branch
      %47 = sbr.rel (0) target = $region33
    $region32: #{tpu_custom_call.1} parent=1 // pred_region
      %48 = dma.done [#allocation4], 128
    $region33: #{tpu_custom_call.1} parent=1 // pred_fallthru
      _
    // Predicated region
    $region34: #{tpu_custom_call.1} parent=1 // pred_check
      _
    $region35: #{tpu_custom_call.1} parent=1 // pred_check_branch
      %50 = sbr.rel (0) target = $region37
    $region36: #{tpu_custom_call.1} parent=1 // pred_region
      %51 = dma.done [#allocation6], 16
    $region37: #{tpu_custom_call.1} parent=1 // pred_fallthru
      _
    %v52 = vld [vmem:[#allocation3] sm:$0xff]
    %v53 = vld [vmem:[%s1] sm:$0xff]
    %v54 = vld [vmem:[%s1 + $0x8] sm:$0xff]
    %v55 = vld [vmem:[#allocation5] sm:$0x1]
    %v57 = vlaneseq
    %v58 = vshrl.u32 %v57, 7
    %v59 = vsub.s32 0, %v58
    %v60 = vrot.slane %v55, %v59
    %vm62 = vcmask 130048
    %v64 = vsel %vm62, %v52, 0
    %66 = vmatprep.subr.mxu0 0.0
    %67 = vmatpush1.msra.mxu0 %v53
    %68 = vmatprep.subr.mxu0 0.0
    %69 = vmatpush1.msra.mxu0 %v54
    %70 = vmatprep.subr.mxu0 0.0
    %71 = vmatpush1.msra.mxu0 0.0
    %72 = vmatprep.subr.mxu0 0.0
    %73 = vmatpush1.msra.mxu0 0.0
    %74 = vmatprep.subr.mxu0 0.0
    %75 = vmatpush1.msra.mxu0 0.0
    %76 = vmatprep.subr.mxu0 0.0
    %77 = vmatpush1.msra.mxu0 0.0
    %78 = vmatprep.subr.mxu0 0.0
    %79 = vmatpush1.msra.mxu0 0.0
    %80 = vmatprep.subr.mxu0 0.0
    %81 = vmatpush1.msra.mxu0 0.0
    %82 = vmatprep.subr.mxu0 0.0
    %83 = vmatpush1.msra.mxu0 0.0
    %84 = vmatprep.subr.mxu0 0.0
    %85 = vmatpush1.msra.mxu0 0.0
    %86 = vmatprep.subr.mxu0 0.0
    %87 = vmatpush1.msra.mxu0 0.0
    %88 = vmatprep.subr.mxu0 0.0
    %89 = vmatpush1.msra.mxu0 0.0
    %90 = vmatprep.subr.mxu0 0.0
    %91 = vmatpush1.msra.mxu0 0.0
    %92 = vmatprep.subr.mxu0 0.0
    %93 = vmatpush1.msra.mxu0 0.0
    %94 = vmatprep.subr.mxu0 0.0
    %95 = vmatpush1.msra.mxu0 0.0
    %96 = vmatprep.subr.mxu0 0.0
    %97 = vmatpush1.msra.mxu0 0.0
    %98 = vmatprep.subr.mxu0 0.0
    %99 = vmatpush1.msra.mxu0 0.0
    %100 = vmatprep.subr.mxu0 0.0
    %101 = vmatpush1.msra.mxu0 0.0
    %102 = vmatprep.subr.mxu0 0.0
    %103 = vmatpush1.msra.mxu0 0.0
    %104 = vmatprep.subr.mxu0 0.0
    %105 = vmatpush1.msra.mxu0 0.0
    %106 = vmatprep.subr.mxu0 0.0
    %107 = vmatpush1.msra.mxu0 0.0
    %108 = vmatprep.subr.mxu0 0.0
    %109 = vmatpush1.msra.mxu0 0.0
    %110 = vmatprep.subr.mxu0 0.0
    %111 = vmatpush1.msra.mxu0 0.0
    %112 = vmatprep.subr.mxu0 0.0
    %113 = vmatpush1.msra.mxu0 0.0
    %114 = vmatprep.subr.mxu0 0.0
    %115 = vmatpush1.msra.mxu0 0.0
    %116 = vmatprep.subr.mxu0 0.0
    %117 = vmatpush1.msra.mxu0 0.0
    %118 = vmatprep.subr.mxu0 0.0
    %119 = vmatpush1.msra.mxu0 0.0
    %120 = vmatprep.subr.mxu0 0.0
    %121 = vmatpush1.msra.mxu0 0.0
    %122 = vmatprep.subr.mxu0 0.0
    %123 = vmatpush1.msra.mxu0 0.0
    %124 = vmatprep.subr.mxu0 0.0
    %125 = vmatpush1.msra.mxu0 0.0
    %126 = vmatprep.subr.mxu0 0.0
    %127 = vmatpush1.msra.mxu0 0.0
    %128 = vmatprep.subr.mxu0 0.0
    %129 = vmatpush1.msra.mxu0 0.0
    %130 = vmatprep.mubr.f32.mxu0 0.0
    %131 = vmatmul.mubr.f32.gmra.mrb[0].mxu0 %v64
    %v132 = vpop.f32.mrb[0].mxu0
    %v133 = vadd.f32 %v60, %v132
    %v134 = vpop.f32.mrb[0].mxu0
    %135 = vdwg.mxu0
    %v136 = vtanh.pop %v133
    %v137 = vld [vmem:[%s3] sm:$0xff]
    %v138 = vld [vmem:[%s3 + $0x8] sm:$0xff]
    %v139 = vld [vmem:[%s3 + $0x10] sm:$0xff]
    %v140 = vld [vmem:[%s3 + $0x18] sm:$0xff]
    %v141 = vld [vmem:[%s4] sm:$0x1]
    %v143 = vlaneseq
    %v144 = vshrl.u32 %v143, 7
    %v145 = vsub.s32 0, %v144
    %v146 = vrot.slane %v141, %v145
    %vm148 = vcmask 261120
    %v150 = vsel %vm148, %v136, 0
    %152 = vmatprep.subr.mxu0 0.0
    %153 = vmatpush1.msra.mxu0 %v137
    %154 = vmatprep.subr.mxu0 0.0
    %155 = vmatpush1.msra.mxu0 %v138
    %156 = vmatprep.subr.mxu0 0.0
    %157 = vmatpush1.msra.mxu0 %v139
    %158 = vmatprep.subr.mxu0 0.0
    %159 = vmatpush1.msra.mxu0 %v140
    %160 = vmatprep.subr.mxu0 0.0
    %161 = vmatpush1.msra.mxu0 0.0
    %162 = vmatprep.subr.mxu0 0.0
    %163 = vmatpush1.msra.mxu0 0.0
    %164 = vmatprep.subr.mxu0 0.0
    %165 = vmatpush1.msra.mxu0 0.0
    %166 = vmatprep.subr.mxu0 0.0
    %167 = vmatpush1.msra.mxu0 0.0
    %168 = vmatprep.subr.mxu0 0.0
    %169 = vmatpush1.msra.mxu0 0.0
    %170 = vmatprep.subr.mxu0 0.0
    %171 = vmatpush1.msra.mxu0 0.0
    %172 = vmatprep.subr.mxu0 0.0
    %173 = vmatpush1.msra.mxu0 0.0
    %174 = vmatprep.subr.mxu0 0.0
    %175 = vmatpush1.msra.mxu0 0.0
    %176 = vmatprep.subr.mxu0 0.0
    %177 = vmatpush1.msra.mxu0 0.0
    %178 = vmatprep.subr.mxu0 0.0
    %179 = vmatpush1.msra.mxu0 0.0
    %180 = vmatprep.subr.mxu0 0.0
    %181 = vmatpush1.msra.mxu0 0.0
    %182 = vmatprep.subr.mxu0 0.0
    %183 = vmatpush1.msra.mxu0 0.0
    %184 = vmatprep.subr.mxu0 0.0
    %185 = vmatpush1.msra.mxu0 0.0
    %186 = vmatprep.subr.mxu0 0.0
    %187 = vmatpush1.msra.mxu0 0.0
    %188 = vmatprep.subr.mxu0 0.0
    %189 = vmatpush1.msra.mxu0 0.0
    %190 = vmatprep.subr.mxu0 0.0
    %191 = vmatpush1.msra.mxu0 0.0
    %192 = vmatprep.subr.mxu0 0.0
    %193 = vmatpush1.msra.mxu0 0.0
    %194 = vmatprep.subr.mxu0 0.0
    %195 = vmatpush1.msra.mxu0 0.0
    %196 = vmatprep.subr.mxu0 0.0
    %197 = vmatpush1.msra.mxu0 0.0
    %198 = vmatprep.subr.mxu0 0.0
    %199 = vmatpush1.msra.mxu0 0.0
    %200 = vmatprep.subr.mxu0 0.0
    %201 = vmatpush1.msra.mxu0 0.0
    %202 = vmatprep.subr.mxu0 0.0
    %203 = vmatpush1.msra.mxu0 0.0
    %204 = vmatprep.subr.mxu0 0.0
    %205 = vmatpush1.msra.mxu0 0.0
    %206 = vmatprep.subr.mxu0 0.0
    %207 = vmatpush1.msra.mxu0 0.0
    %208 = vmatprep.subr.mxu0 0.0
    %209 = vmatpush1.msra.mxu0 0.0
    %210 = vmatprep.subr.mxu0 0.0
    %211 = vmatpush1.msra.mxu0 0.0
    %212 = vmatprep.subr.mxu0 0.0
    %213 = vmatpush1.msra.mxu0 0.0
    %214 = vmatprep.subr.mxu0 0.0
    %215 = vmatpush1.msra.mxu0 0.0
    %216 = vmatprep.mubr.f32.mxu0 0.0
    %217 = vmatmul.mubr.f32.gmra.mrb[0].mxu0 %v150
    %v218 = vpop.f32.mrb[0].mxu0
    %v219 = vadd.f32 %v146, %v218
    %v220 = vpop.f32.mrb[0].mxu0
    %221 = vdwg.mxu0
    %v222 = vtanh.pop %v219
    %v223 = vld [vmem:[%s5] sm:$0xff]
    %v224 = vld [vmem:[%s5 + $0x8] sm:$0xff]
    %v225 = vld [vmem:[%s5 + $0x10] sm:$0xff]
    %v226 = vld [vmem:[%s5 + $0x18] sm:$0xff]
    %v227 = vld [vmem:[#allocation2] sm:$0x1]
    %v229 = vlaneseq
    %v230 = vshrl.u32 %v229, 7
    %v231 = vsub.s32 0, %v230
    %v232 = vrot.slane %v227, %v231
    %v235 = vsel %vm148, %v222, 0
    %237 = vmatprep.subr.mxu0 0.0
    %238 = vmatpush1.msra.mxu0 %v223
    %239 = vmatprep.subr.mxu0 0.0
    %240 = vmatpush1.msra.mxu0 %v224
    %241 = vmatprep.subr.mxu0 0.0
    %242 = vmatpush1.msra.mxu0 %v225
    %243 = vmatprep.subr.mxu0 0.0
    %244 = vmatpush1.msra.mxu0 %v226
    %245 = vmatprep.subr.mxu0 0.0
    %246 = vmatpush1.msra.mxu0 0.0
    %247 = vmatprep.subr.mxu0 0.0
    %248 = vmatpush1.msra.mxu0 0.0
    %249 = vmatprep.subr.mxu0 0.0
    %250 = vmatpush1.msra.mxu0 0.0
    %251 = vmatprep.subr.mxu0 0.0
    %252 = vmatpush1.msra.mxu0 0.0
    %253 = vmatprep.subr.mxu0 0.0
    %254 = vmatpush1.msra.mxu0 0.0
    %255 = vmatprep.subr.mxu0 0.0
    %256 = vmatpush1.msra.mxu0 0.0
    %257 = vmatprep.subr.mxu0 0.0
    %258 = vmatpush1.msra.mxu0 0.0
    %259 = vmatprep.subr.mxu0 0.0
    %260 = vmatpush1.msra.mxu0 0.0
    %261 = vmatprep.subr.mxu0 0.0
    %262 = vmatpush1.msra.mxu0 0.0
    %263 = vmatprep.subr.mxu0 0.0
    %264 = vmatpush1.msra.mxu0 0.0
    %265 = vmatprep.subr.mxu0 0.0
    %266 = vmatpush1.msra.mxu0 0.0
    %267 = vmatprep.subr.mxu0 0.0
    %268 = vmatpush1.msra.mxu0 0.0
    %269 = vmatprep.subr.mxu0 0.0
    %270 = vmatpush1.msra.mxu0 0.0
    %271 = vmatprep.subr.mxu0 0.0
    %272 = vmatpush1.msra.mxu0 0.0
    %273 = vmatprep.subr.mxu0 0.0
    %274 = vmatpush1.msra.mxu0 0.0
    %275 = vmatprep.subr.mxu0 0.0
    %276 = vmatpush1.msra.mxu0 0.0
    %277 = vmatprep.subr.mxu0 0.0
    %278 = vmatpush1.msra.mxu0 0.0
    %279 = vmatprep.subr.mxu0 0.0
    %280 = vmatpush1.msra.mxu0 0.0
    %281 = vmatprep.subr.mxu0 0.0
    %282 = vmatpush1.msra.mxu0 0.0
    %283 = vmatprep.subr.mxu0 0.0
    %284 = vmatpush1.msra.mxu0 0.0
    %285 = vmatprep.subr.mxu0 0.0
    %286 = vmatpush1.msra.mxu0 0.0
    %287 = vmatprep.subr.mxu0 0.0
    %288 = vmatpush1.msra.mxu0 0.0
    %289 = vmatprep.subr.mxu0 0.0
    %290 = vmatpush1.msra.mxu0 0.0
    %291 = vmatprep.subr.mxu0 0.0
    %292 = vmatpush1.msra.mxu0 0.0
    %293 = vmatprep.subr.mxu0 0.0
    %294 = vmatpush1.msra.mxu0 0.0
    %295 = vmatprep.subr.mxu0 0.0
    %296 = vmatpush1.msra.mxu0 0.0
    %297 = vmatprep.subr.mxu0 0.0
    %298 = vmatpush1.msra.mxu0 0.0
    %299 = vmatprep.subr.mxu0 0.0
    %300 = vmatpush1.msra.mxu0 0.0
    %301 = vmatprep.mubr.f32.mxu0 0.0
    %302 = vmatmul.mubr.f32.gmra.mrb[0].mxu0 %v235
    %v303 = vpop.f32.mrb[0].mxu0
    %v304 = vadd.f32 %v232, %v303
    %v305 = vpop.f32.mrb[0].mxu0
    %306 = vdwg.mxu0
    %vm307 = vcmask 7168
    %308 = vst.msk [vmem:[%s7] sm:$0xff] %vm307, %v304
    // Predicated region
    $region38: #{tpu_custom_call.1} parent=1 // pred_check
      _
    $region39: #{tpu_custom_call.1} parent=1 // pred_check_branch
      %310 = sbr.rel (0) target = $region41
    $region40: #{tpu_custom_call.1} parent=1 // pred_region
      _
    $region41: #{tpu_custom_call.1} parent=1 // pred_fallthru
      _
    // Predicated region
    $region42: #{tpu_custom_call.1} parent=1 // pred_check
      _
    $region43: #{tpu_custom_call.1} parent=1 // pred_check_branch
      %312 = sbr.rel (0) target = $region45
    $region44: #{tpu_custom_call.1} parent=1 // pred_region
      _
    $region45: #{tpu_custom_call.1} parent=1 // pred_fallthru
      _
    %313 = vsyncpa [#allocation4], 1
    %314 = vsyncpa [#allocation6], 1

</llo_original>
